<compile_context>
chip_gen: v6e
topology: v6e:2x2x1
jax: 0.10.0
libtpu: 0.0.40
codegen_flags: <defaults>
</compile_context>

<pallas_src>
import functools

import jax
import jax.numpy as jnp
from jax.experimental import pallas as pl
from jax.experimental.pallas import tpu as pltpu


def _pooled_relu_conv_kernel(x_ref, w1_ref, b1_ref, out_ref, acc_ref, *,
                             n_points_total, tile_n):
    """grid = (B, cdiv(N, tile_n)); emits sum_n relu(W1 x_n + b1) per batch."""
    j = pl.program_id(1)
    last = pl.num_programs(1) - 1

    @pl.when(j == 0)
    def _init():
        acc_ref[...] = jnp.zeros_like(acc_ref)

    x_blk = x_ref[0]                                     # (C_in, TN) native NCW tile

    # Conv1d(C_in -> dim, k=1): (dim, C_in) @ (C_in, TN) on the MXU, bias col, ReLU.
    z = jnp.dot(w1_ref[...], x_blk,
                preferred_element_type=jnp.float32) + b1_ref[...]
    z = jnp.maximum(z, 0.0)

    if n_points_total % tile_n != 0:
        # Ragged tail: ReLU(b1) != 0 in padded columns, so the last tile must be
        # masked (the N*b2 fusion in the head relies on this).  Only the last
        # tile pays for the iota/compare/select.
        @pl.when(j != last)
        def _full_tile():
            acc_ref[...] += jnp.sum(z, axis=1, keepdims=True)

        @pl.when(j == last)
        def _ragged_tile():
            col = j * tile_n + jax.lax.broadcasted_iota(jnp.int32, (1, tile_n), 1)
            zm = jnp.where(col < n_points_total, z, 0.0)
            acc_ref[...] += jnp.sum(zm, axis=1, keepdims=True)
    else:
        acc_ref[...] += jnp.sum(z, axis=1, keepdims=True)

    @pl.when(j == last)
    def _finalize():
        out_ref[0] = acc_ref[...].astype(out_ref.dtype)  # (dim, 1) pooled column


def _auto_tile_n(c_in, dim):
    """Pick a point-tile: ~1 MiB of streamed x, <= ~4 MiB (dim, tile) activation."""
    cap_from_x = (1 << 20) // (4 * c_in)
    cap_from_z = (4 << 20) // (4 * dim)
    t = min(cap_from_x, cap_from_z)
    return max(128, (t // 128) * 128)


def pooled_first_conv(x_ncw, w1, b1, *, tile_n=None):
    """Pallas kernel: returns sum_n relu(W1 x[:, :, n] + b1) with shape (B, dim)."""
    B, C_in, N = x_ncw.shape
    dim = w1.shape[0]

    if tile_n is None:
        tile_n = _auto_tile_n(C_in, dim)
    if N <= tile_n:
        tn = N                              # single full-extent tile
    else:
        assert tile_n % 128 == 0, "point tile must be a multiple of 128 when N > tile"
        tn = tile_n
    n_tiles = pl.cdiv(N, tn)

    kernel = functools.partial(_pooled_relu_conv_kernel,
                               n_points_total=N, tile_n=tn)

    # Streamed x spec; deeper pipelining only when tiles are unavoidably tiny.
    x_block = (1, C_in, tn)
    x_index = lambda b, j: (b, 0, j)
    if n_tiles >= 3 and C_in * tn * 4 < (512 << 10) and hasattr(pl, "Buffered"):
        x_spec = pl.BlockSpec(x_block, x_index, pipeline_mode=pl.Buffered(3))
    else:
        x_spec = pl.BlockSpec(x_block, x_index)

    def full(a):  # whole-array, VMEM-resident block (constant index map)
        return pl.BlockSpec(a.shape, lambda b, j: (0,) * a.ndim)

    flops = 2 * B * N * C_in * dim + 2 * B * N * dim        # conv + relu/reduce
    bytes_accessed = 4 * (x_ncw.size + int(w1.size) + int(b1.size) + B * dim)

    pooled3 = pl.pallas_call(
        kernel,
        out_shape=jax.ShapeDtypeStruct((B, dim, 1), jnp.float32),
        grid_spec=pltpu.PrefetchScalarGridSpec(
            num_scalar_prefetch=0,
            grid=(B, n_tiles),
            in_specs=[x_spec, full(w1), full(b1)],
            out_specs=pl.BlockSpec((1, dim, 1), lambda b, j: (b, 0, 0)),
            scratch_shapes=[pltpu.VMEM((dim, 1), jnp.float32)],
        ),
        compiler_params=pltpu.CompilerParams(
            dimension_semantics=("parallel", "arbitrary")),   # batch across TCs
        cost_estimate=pl.CostEstimate(flops=int(flops), transcendentals=0,
                                      bytes_accessed=int(bytes_accessed)),
    )(x_ncw, w1, b1)

    return pooled3[:, :, 0]                                   # (B, dim)


def sum_encoder_forward(x_ncw, params, n_points=None, *, tile_n=None):
    """x_ncw: (B, C_in, N) float32, exactly the PyTorch NCW Conv1d input layout."""
    del n_points  # unused by SumEncoder.forward (kept for signature fidelity)
    w1, b1, w2, b2, w3, b3, w4, b4 = params
    _, _, N = x_ncw.shape

    pooled = pooled_first_conv(x_ncw, w1, b1, tile_n=tile_n)  # (B, dim)

    # Post-sum head as well-shaped (B, dim) GEMMs in XLA.
    # Fused Conv1d(dim->dim, k=1) after the point sum:
    #   sum_n (W2 h_n + b2) = W2 (sum_n h_n) + N * b2
    # (float32(N) is exact for any realistic point count; only breaks past 2^24.)
    t = pooled @ w2.T + jnp.float32(N) * b2[:, 0]
    g = jnp.maximum(t @ w3.T + b3[:, 0], 0.0)                 # Linear + ReLU
    out = g @ w4.T + b4[:, 0]                                 # Linear(dim -> out)

    # PyTorch returns (x, x.clone()); JAX arrays are immutable so the same array
    # twice is semantically equivalent (no extra HBM round-trip).
    return out, out


def init_params(key, *, input_channels, output_channels, dim):
    """PyTorch-native layouts: conv/linear weights are (out, in), biases (out, 1)."""
    ks = jax.random.split(key, 8)

    def u(k, shape, fan_in):
        bound = 1.0 / float(fan_in) ** 0.5
        return jax.random.uniform(k, shape, jnp.float32, -bound, bound)

    w1 = u(ks[0], (dim, input_channels), input_channels)      # Conv1d(C_in, dim, 1)
    b1 = u(ks[1], (dim, 1), input_channels)
    w2 = u(ks[2], (dim, dim), dim)                            # Conv1d(dim, dim, 1)
    b2 = u(ks[3], (dim, 1), dim)
    w3 = u(ks[4], (dim, dim), dim)                            # Linear(dim, dim)
    b3 = u(ks[5], (dim, 1), dim)
    w4 = u(ks[6], (output_channels, dim), dim)                # Linear(dim, out)
    b4 = u(ks[7], (output_channels, 1), dim)
    return (w1, b1, w2, b2, w3, b3, w4, b4)


def _reference(x_ncw, params):
    """Pure-JAX reference of the PyTorch forward (unfused), for correctness checks."""
    w1, b1, w2, b2, w3, b3, w4, b4 = params
    h = jnp.maximum(jnp.einsum('dc,bcn->bdn', w1, x_ncw) + b1[None], 0.0)
    h = jnp.einsum('ed,bdn->ben', w2, h) + b2[None]
    s = h.sum(axis=2)                                         # (B, dim)
    g = jnp.maximum(s @ w3.T + b3[:, 0], 0.0)
    return g @ w4.T + b4[:, 0]


if __name__ == "__main__":
    B, C_IN, N = 2, 4, 16
    DIM, OUT = 32, 8

    key = jax.random.PRNGKey(0)
    k_x, k_p, k_x2 = jax.random.split(key, 3)
    x = jax.random.normal(k_x, (B, C_IN, N), dtype=jnp.float32)   # PyTorch NCW input
    n_points = jnp.full((B,), N, dtype=jnp.int32)                 # unused by forward
    params = init_params(k_p, input_channels=C_IN, output_channels=OUT, dim=DIM)

    # Check 1: small N, single full-extent tile.
    out, out_clone = sum_encoder_forward(x, params, n_points)
    jax.block_until_ready((out, out_clone))
    ref = _reference(x, params)
    assert out.shape == (B, OUT) and out_clone.shape == (B, OUT)
    assert jnp.allclose(out, ref, atol=1e-4, rtol=1e-4)
    assert jnp.allclose(out_clone, ref, atol=1e-4, rtol=1e-4)

    # Check 2: larger N with the auto-chosen (large) tile.
    N2 = 1000
    x2 = jax.random.normal(k_x2, (B, C_IN, N2), dtype=jnp.float32)
    out2, _ = sum_encoder_forward(x2, params, None)
    jax.block_until_ready(out2)
    ref2 = _reference(x2, params)
    assert jnp.allclose(out2, ref2, atol=2e-3, rtol=2e-3)

    # Check 3: forced small tiles -> exercises the tiled reduction, the gated
    # ragged-tail mask (1000 % 256 != 0) and the deeper (3-buffer) x pipeline.
    out3, _ = sum_encoder_forward(x2, params, None, tile_n=256)
    jax.block_until_ready(out3)
    assert jnp.allclose(out3, ref2, atol=2e-3, rtol=2e-3)

    print("KERNEL_OK")
</pallas_src>

<mosaic_0001>
module attributes {stable_mosaic.version = 11 : i64} {
  func.func @_pooled_relu_conv_kernel(%arg0: i32, %arg1: i32, %arg2: memref<1x4x16xf32, #tpu.memory_space<vmem>>, %arg3: memref<32x4xf32, #tpu.memory_space<vmem>>, %arg4: memref<32x1xf32, #tpu.memory_space<vmem>>, %arg5: memref<1x32x1xf32, #tpu.memory_space<vmem>>, %arg6: memref<32x1xf32, #tpu.memory_space<vmem>>) attributes {dimension_semantics = [#tpu.dimension_semantics<parallel>, #tpu.dimension_semantics<arbitrary>], iteration_bounds = array<i64: 2, 1>, scalar_prefetch = 0 : i64, scratch_operands = 1 : i64, tpu.core_type = #tpu.core_type<tc>, window_params = [{transform_indices = @transform_0, window_bounds = array<i64: 1, 4, 16>}, {pipeline_mode = #tpu.pipeline_mode<synchronous>, transform_indices = @transform_1, window_bounds = array<i64: 32, 4>}, {pipeline_mode = #tpu.pipeline_mode<synchronous>, transform_indices = @transform_2, window_bounds = array<i64: 32, 1>}, {transform_indices = @transform_3, window_bounds = array<i64: 1, 32, 1>}]} {
    %c0_i32 = arith.constant 0 : i32
    %0 = arith.cmpi eq, %arg1, %c0_i32 : i32
    %1 = arith.extui %0 : i1 to i32
    %c0_i32_0 = arith.constant 0 : i32
    %2 = arith.cmpi ne, %1, %c0_i32_0 : i32
    scf.if %2 {
      %cst_15 = arith.constant 0.000000e+00 : f32
      %20 = vector.broadcast %cst_15 : f32 to vector<32x1xf32>
      %c0_16 = arith.constant 0 : index
      %c0_17 = arith.constant 0 : index
      %21 = vector.load %arg6[%c0_16, %c0_17] : memref<32x1xf32, #tpu.memory_space<vmem>>, vector<32x1xf32>
      tpu.vector_store %arg6[%c0_16, %c0_17], %20 {strides = array<i32>} : memref<32x1xf32, #tpu.memory_space<vmem>>, vector<32x1xf32>,
    } else {
    }
    %c0 = arith.constant 0 : index
    %c0_1 = arith.constant 0 : index
    %c0_2 = arith.constant 0 : index
    %3 = vector.load %arg2[%c0, %c0_1, %c0_2] : memref<1x4x16xf32, #tpu.memory_space<vmem>>, vector<1x4x16xf32>
    %4 = vector.shape_cast %3 : vector<1x4x16xf32> to vector<4x16xf32>
    %c0_3 = arith.constant 0 : index
    %c0_4 = arith.constant 0 : index
    %5 = vector.load %arg3[%c0_3, %c0_4] : memref<32x4xf32, #tpu.memory_space<vmem>>, vector<32x4xf32>
    %cst = arith.constant dense<0.000000e+00> : vector<32x16xf32>
    %6 = tpu.matmul %5, %4, %cst {dimension_numbers = #tpu.dot_dimension_numbers<[1], [0], [0], [1], [0, 0, 1, 1], [], []>} : vector<32x4xf32>, vector<4x16xf32>, vector<32x16xf32> -> vector<32x16xf32>
    %c0_5 = arith.constant 0 : index
    %c0_6 = arith.constant 0 : index
    %7 = vector.load %arg4[%c0_5, %c0_6] : memref<32x1xf32, #tpu.memory_space<vmem>>, vector<32x1xf32>
    %8 = vector.broadcast %7 : vector<32x1xf32> to vector<32x16xf32>
    %9 = arith.addf %6, %8 : vector<32x16xf32>
    %cst_7 = arith.constant 0.000000e+00 : f32
    %10 = vector.broadcast %cst_7 : f32 to vector<32x16xf32>
    %11 = arith.maximumf %9, %10 : vector<32x16xf32>
    %c0_8 = arith.constant 0 : index
    %c0_9 = arith.constant 0 : index
    %12 = vector.load %arg6[%c0_8, %c0_9] : memref<32x1xf32, #tpu.memory_space<vmem>>, vector<32x1xf32>
    %cst_10 = arith.constant dense<0.000000e+00> : vector<32xf32>
    %13 = vector.multi_reduction <add>, %11, %cst_10 [1] : vector<32x16xf32> to vector<32xf32>
    %14 = vector.shape_cast %13 : vector<32xf32> to vector<32x1xf32>
    %15 = arith.addf %12, %14 : vector<32x1xf32>
    %c0_11 = arith.constant 0 : index
    %c0_12 = arith.constant 0 : index
    %16 = vector.load %arg6[%c0_11, %c0_12] : memref<32x1xf32, #tpu.memory_space<vmem>>, vector<32x1xf32>
    tpu.vector_store %arg6[%c0_11, %c0_12], %15 {strides = array<i32>} : memref<32x1xf32, #tpu.memory_space<vmem>>, vector<32x1xf32>,
    %c0_i32_13 = arith.constant 0 : i32
    %17 = arith.cmpi eq, %arg1, %c0_i32_13 : i32
    %18 = arith.extui %17 : i1 to i32
    %c0_i32_14 = arith.constant 0 : i32
    %19 = arith.cmpi ne, %18, %c0_i32_14 : i32
    scf.if %19 {
      %c0_15 = arith.constant 0 : index
      %c0_16 = arith.constant 0 : index
      %20 = vector.load %arg6[%c0_15, %c0_16] : memref<32x1xf32, #tpu.memory_space<vmem>>, vector<32x1xf32>
      %c0_17 = arith.constant 0 : index
      %c0_18 = arith.constant 0 : index
      %c0_19 = arith.constant 0 : index
      %21 = vector.load %arg5[%c0_17, %c0_18, %c0_19] : memref<1x32x1xf32, #tpu.memory_space<vmem>>, vector<1x32x1xf32>
      %22 = vector.shape_cast %21 : vector<1x32x1xf32> to vector<32x1xf32>
      %23 = vector.shape_cast %20 : vector<32x1xf32> to vector<1x32x1xf32>
      tpu.vector_store %arg5[%c0_17, %c0_18, %c0_19], %23 {strides = array<i32>} : memref<1x32x1xf32, #tpu.memory_space<vmem>>, vector<1x32x1xf32>,
    } else {
    }
    return
  }
  func.func @transform_0(%arg0: i32, %arg1: i32) -> (i32, i32, i32) {
    %c0_i32 = arith.constant 0 : i32
    %c0_i32_0 = arith.constant 0 : i32
    return %arg0, %c0_i32, %arg1 : i32, i32, i32
  }
  func.func @transform_1(%arg0: i32, %arg1: i32) -> (i32, i32) {
    %c0_i32 = arith.constant 0 : i32
    %c0_i32_0 = arith.constant 0 : i32
    %c0_i32_1 = arith.constant 0 : i32
    return %c0_i32, %c0_i32_0 : i32, i32
  }
  func.func @transform_2(%arg0: i32, %arg1: i32) -> (i32, i32) {
    %c0_i32 = arith.constant 0 : i32
    %c0_i32_0 = arith.constant 0 : i32
    %c0_i32_1 = arith.constant 0 : i32
    return %c0_i32, %c0_i32_0 : i32, i32
  }
  func.func @transform_3(%arg0: i32, %arg1: i32) -> (i32, i32, i32) {
    %c0_i32 = arith.constant 0 : i32
    %c0_i32_0 = arith.constant 0 : i32
    %c0_i32_1 = arith.constant 0 : i32
    return %arg0, %c0_i32, %c0_i32_0 : i32, i32, i32
  }
}

</mosaic_0001>

<llo_original>
// kernel: tpu_custom_call.1
$region0: #{tpu_custom_call.1}
  #allocation0 [shape = 'u32[]', space=smem, size = 0x4, offset = 0x4, fixed_abs, tag = 'smem constant byte address 0x4 - core index']
  #allocation1 [shape = 'u32[144,128]{1,0:T(1,128)}', space=vmem, size = 0x12000, scoped, tag = 'internal scratch']
  #allocation2 [shape = 'f32[32,1]{1,0:T(8,128)}', space=vmem, size = 0x4000, scoped, tag = 'scratch operand']
  %s0 = inlined_call_operand.vmem [shape: f32[2,4,16], index: 0, kind: input, shape index: {}]
  %s1 = inlined_call_operand.vmem [shape: f32[32,4], index: 1, kind: input, shape index: {}]
  %s2 = inlined_call_operand.vmem [shape: f32[32,1], index: 2, kind: input, shape index: {}]
  %s3 = inlined_call_operand.vmem [shape: f32[2,32,1], index: 3, kind: output, shape index: {}]
  %s4 = sld [smem:[#allocation0]]
  $region53: #{tpu_custom_call.1} parent=0
    _
  %s6 = ssub.s32 1, %s4
  %s7 = scalar_select 0, %s6, %s4
  loop: start=0, step=1, limit=4
  $region2: #{tpu_custom_call.1} parent=0 // loop_pre_header
    _
  $region3: #{tpu_custom_call.1} parent=0 // loop_header
    %s9 = sphi 0, %s13
    %p10 = scmp.ge.s32.totalorder %s9, 4
    %s16 = sphi 0, %s28
    %s17 = sphi 0, %s24
    %s18 = sphi 0, %s16
    %s19 = sphi 0, %s17
    %s20 = sphi 0, %s18
    %s21 = sphi 0, %s19
    %s33 = sphi 0, %s35
    %s36 = sphi 0, %s33
    %s37 = sphi 0, %s36
    %s53 = sphi 0, %s37
    %s57 = sphi 0, %s57
    %s59 = sphi 0, %s57
    %s60 = sphi 0, %s59
    %s74 = sphi 0, %s60
    %s78 = sphi 0, %s78
    %s80 = sphi 0, %s78
    %s81 = sphi 0, %s80
    %s95 = sphi 0, %s81
    %s101 = sphi 0, %s103
    %s104 = sphi 0, %s101
    %s105 = sphi 0, %s104
    %s121 = sphi 0, %s105
  $region4: #{tpu_custom_call.1} parent=0 // loop_header_branch
    %12 = sbr.rel (%p10) target = $region8
  $region5: #{tpu_custom_call.1} parent=0 // loop_body
    %s14 = ssub.s32 %s9, 1
    %s15 = ssub.s32 %s9, 2
    %s22 = sadd.s32 1, %s17
    %p23 = scmp.ge.s32.totalorder %s22, 1
    %s24 = scalar_select %p23, 0, %s22
    %s25 = sadd.s32 1, %s16
    %s26 = scalar_select %p23, %s25, %s16
    %p27 = scmp.ge.s32.totalorder %s26, 2
    %s28 = scalar_select %p27, 0, %s26
    %s29 = ssub.s32 %s16, %s28
    %s30 = ssub.s32 %s17, %s24
    %s31 = sor.u32 %s29, %s30
    %p32 = scmp.eq.s32.totalorder %s31, 0
    %s34 = sadd.s32 %s33, 1
    %s35 = scalar_select %p32, %s33, %s34
    %p38 = pneg %p32
    %p39 = scmp.eq.s32.totalorder %s9, 1
    %p40 = por %p38, %p39
    %p41 = scmp.ne.s32.totalorder %s33, %s36
    %p42 = scmp.eq.s32.totalorder %s9, 0
    %p43 = por %p41, %p42
    %p44 = scmp.ne.s32.totalorder %s33, %s36
    %p45 = scmp.eq.s32.totalorder %s14, 1
    %p46 = por %p44, %p45
    %p47 = scmp.ne.s32.totalorder %s36, %s37
    %p48 = scmp.eq.s32.totalorder %s14, 0
    %p49 = por %p47, %p48
    %p50 = scmp.ne.s32.totalorder %s36, %s37
    %p51 = scmp.eq.s32.totalorder %s15, 1
    %p52 = por %p50, %p51
    %p54 = scmp.ne.s32.totalorder %s37, %s53
    %p55 = scmp.eq.s32.totalorder %s15, 0
    %p56 = por %p54, %p55
    %s58 = sadd.s32 %s57, 1
    %p61 = scmp.eq.s32.totalorder %s9, 1
    %p62 = scmp.ne.s32.totalorder %s57, %s59
    %p63 = scmp.eq.s32.totalorder %s9, 0
    %p64 = por %p62, %p63
    %p65 = scmp.ne.s32.totalorder %s57, %s59
    %p66 = scmp.eq.s32.totalorder %s14, 1
    %p67 = por %p65, %p66
    %p68 = scmp.ne.s32.totalorder %s59, %s60
    %p69 = scmp.eq.s32.totalorder %s14, 0
    %p70 = por %p68, %p69
    %p71 = scmp.ne.s32.totalorder %s59, %s60
    %p72 = scmp.eq.s32.totalorder %s15, 1
    %p73 = por %p71, %p72
    %p75 = scmp.ne.s32.totalorder %s60, %s74
    %p76 = scmp.eq.s32.totalorder %s15, 0
    %p77 = por %p75, %p76
    %s79 = sadd.s32 %s78, 1
    %p82 = scmp.eq.s32.totalorder %s9, 1
    %p83 = scmp.ne.s32.totalorder %s78, %s80
    %p84 = scmp.eq.s32.totalorder %s9, 0
    %p85 = por %p83, %p84
    %p86 = scmp.ne.s32.totalorder %s78, %s80
    %p87 = scmp.eq.s32.totalorder %s14, 1
    %p88 = por %p86, %p87
    %p89 = scmp.ne.s32.totalorder %s80, %s81
    %p90 = scmp.eq.s32.totalorder %s14, 0
    %p91 = por %p89, %p90
    %p92 = scmp.ne.s32.totalorder %s80, %s81
    %p93 = scmp.eq.s32.totalorder %s15, 1
    %p94 = por %p92, %p93
    %p96 = scmp.ne.s32.totalorder %s81, %s95
    %p97 = scmp.eq.s32.totalorder %s15, 0
    %p98 = por %p96, %p97
    %s99 = ssub.s32 %s16, %s28
    %p100 = scmp.eq.s32.totalorder %s99, 0
    %s102 = sadd.s32 %s101, 1
    %s103 = scalar_select %p100, %s101, %s102
    %p106 = pneg %p100
    %p107 = scmp.eq.s32.totalorder %s9, 1
    %p108 = por %p106, %p107
    %p109 = scmp.ne.s32.totalorder %s101, %s104
    %p110 = scmp.eq.s32.totalorder %s9, 0
    %p111 = por %p109, %p110
    %p112 = scmp.ne.s32.totalorder %s101, %s104
    %p113 = scmp.eq.s32.totalorder %s14, 1
    %p114 = por %p112, %p113
    %p115 = scmp.ne.s32.totalorder %s104, %s105
    %p116 = scmp.eq.s32.totalorder %s14, 0
    %p117 = por %p115, %p116
    %p118 = scmp.ne.s32.totalorder %s104, %s105
    %p119 = scmp.eq.s32.totalorder %s15, 1
    %p120 = por %p118, %p119
    %p122 = scmp.ne.s32.totalorder %s105, %s121
    %p123 = scmp.eq.s32.totalorder %s15, 0
    %p124 = por %p122, %p123
    %p125 = scmp.le.s32.totalorder 1, %s9
    %p126 = scmp.lt.s32.totalorder %s9, 3
    %p127 = pnand %p125, %p126
    %p128 = pneg %p127
    // Predicated region
    $region9: #{tpu_custom_call.1} parent=5 // pred_check
      _
    $region10: #{tpu_custom_call.1} parent=5 // pred_check_branch
      %130 = sbr.rel (%p127) target = $region12
    $region11: #{tpu_custom_call.1} parent=5 // pred_region
      %s131 = ssub.s32 %s9, 1
      // Predicated region
      $region13: #{tpu_custom_call.1} parent=11 // pred_check
        %p132 = pneg %p70
      $region14: #{tpu_custom_call.1} parent=11 // pred_check_branch
        %134 = sbr.rel (%p132) target = $region16
      $region15: #{tpu_custom_call.1} parent=11 // pred_region
        _
      $region16: #{tpu_custom_call.1} parent=11 // pred_fallthru
        _
      // Predicated region
      $region17: #{tpu_custom_call.1} parent=11 // pred_check
        %p135 = pneg %p91
      $region18: #{tpu_custom_call.1} parent=11 // pred_check_branch
        %137 = sbr.rel (%p135) target = $region20
      $region19: #{tpu_custom_call.1} parent=11 // pred_region
        _
      $region20: #{tpu_custom_call.1} parent=11 // pred_fallthru
        _
    $region12: #{tpu_custom_call.1} parent=5 // pred_fallthru
      _
    %p138 = scmp.lt.s32.totalorder %s9, 2
    // Predicated region
    $region21: #{tpu_custom_call.1} parent=5 // pred_check
      %p139 = pneg %p138
    $region22: #{tpu_custom_call.1} parent=5 // pred_check_branch
      %141 = sbr.rel (%p139) target = $region24
    $region23: #{tpu_custom_call.1} parent=5 // pred_region
      // Predicated region
      $region25: #{tpu_custom_call.1} parent=23 // pred_check
        %p142 = pneg %p43
      $region26: #{tpu_custom_call.1} parent=23 // pred_check_branch
        %144 = sbr.rel (%p142) target = $region28
      $region27: #{tpu_custom_call.1} parent=23 // pred_region
        %p145 = scmp.lt.s32.totalorder %s16, 1
        %s146 = scalar_select %p145, %s16, 1
        %p147 = scmp.lt.s32.totalorder %s17, 0
        %s148 = scalar_select %p147, %s17, 0
        %s149 = sadd.s32 %s148, %s146
        %s150 = smul.addr %s149, 4
        %s151 = scalar_lea.vmem %s0, %s150
      $region28: #{tpu_custom_call.1} parent=23 // pred_fallthru
        _
    $region24: #{tpu_custom_call.1} parent=5 // pred_fallthru
      _
    %p152 = scmp.le.s32.totalorder 1, %s9
    %p153 = scmp.lt.s32.totalorder %s9, 3
    %p154 = pnand %p152, %p153
    %p155 = pneg %p154
    // Predicated region
    $region29: #{tpu_custom_call.1} parent=5 // pred_check
      _
    $region30: #{tpu_custom_call.1} parent=5 // pred_check_branch
      %157 = sbr.rel (%p154) target = $region32
    $region31: #{tpu_custom_call.1} parent=5 // pred_region
      %s158 = ssub.s32 %s9, 1
      %p159 = scmp.lt.s32.totalorder %s18, 1
      %s160 = scalar_select %p159, %s18, 1
      %p161 = scmp.lt.s32.totalorder %s19, 0
      %s162 = scalar_select %p161, %s19, 0
      %s163 = sadd.s32 %s162, %s160
      %s164 = smul.addr %s163, 4
      %s165 = scalar_lea.vmem %s0, %s164
      %p166 = pneg %p49
      %p167 = pneg %p46
      %p168 = pneg %p70
      %p169 = pneg %p67
      %p170 = pneg %p91
      %p171 = pneg %p88
      %p172 = pneg %p117
      %p173 = pneg %p114
      %p174 = scmp.lt.s32.totalorder %s18, 1
      %s175 = scalar_select %p174, %s18, 1
      %s176 = smul.addr %s175, 4
      %s177 = smul.addr %s176, 8
      %s178 = scalar_lea.vmem %s3, %s177
      %p179 = scmp.lt.s32.totalorder %s18, 1
      %s180 = scalar_select %p179, %s18, 1
      %p181 = scmp.lt.s32.totalorder %s19, 0
      %s182 = scalar_select %p181, %s19, 0
      %s183 = sadd.s32 %s182, %s180
      %s184 = smul.addr %s183, 4
      %s185 = scalar_lea.vmem %s0, %s184
      %p186 = scmp.lt.s32.totalorder %s18, 1
      %s187 = scalar_select %p186, %s18, 1
      %s188 = smul.addr %s187, 4
      %s189 = smul.addr %s188, 8
      %s190 = scalar_lea.vmem %s3, %s189
      %p191 = scmp.eq.s32.totalorder %s19, 0
      // Predicated region
      $region33: #{tpu_custom_call.1} parent=31 // pred_check
        %p192 = pneg %p191
      $region34: #{tpu_custom_call.1} parent=31 // pred_check_branch
        %194 = sbr.rel (%p192) target = $region36
      $region35: #{tpu_custom_call.1} parent=31 // pred_region
        %vm195 = vcmask 7168
        %196 = vst.msk [vmem:[#allocation2] sm:$0xff] %vm195, 0.0
        %197 = vst.msk [vmem:[#allocation2 + $0x8] sm:$0xff] %vm195, 0.0
        %198 = vst.msk [vmem:[#allocation2 + $0x10] sm:$0xff] %vm195, 0.0
        %199 = vst.msk [vmem:[#allocation2 + $0x18] sm:$0xff] %vm195, 0.0
      $region36: #{tpu_custom_call.1} parent=31 // pred_fallthru
        _
      %v200 = vld [vmem:[%s185] sm:$0xf]
      %v201 = vld [vmem:[%s1] sm:$0xff]
      %v202 = vld [vmem:[%s1 + $0x8] sm:$0xff]
      %v203 = vld [vmem:[%s1 + $0x10] sm:$0xff]
      %v204 = vld [vmem:[%s1 + $0x18] sm:$0xff]
      %v205 = vld [vmem:[%s2] sm:$0xff]
      %v206 = vld [vmem:[%s2 + $0x8] sm:$0xff]
      %v207 = vld [vmem:[%s2 + $0x10] sm:$0xff]
      %v208 = vld [vmem:[%s2 + $0x18] sm:$0xff]
      %210 = vset.pattern.permute.xlu0 0
      %211 = vperm.xlu0 %210, %v205
      %v212 = vpop.permute.xlu0 %211
      %215 = vset.pattern.permute.xlu0 0
      %216 = vperm.xlu0 %215, %v206
      %v217 = vpop.permute.xlu0 %216
      %220 = vset.pattern.permute.xlu0 0
      %221 = vperm.xlu0 %220, %v207
      %v222 = vpop.permute.xlu0 %221
      %225 = vset.pattern.permute.xlu0 0
      %226 = vperm.xlu0 %225, %v208
      %v227 = vpop.permute.xlu0 %226
      %vm229 = vcmask 31744
      %v231 = vsel %vm229, %v201, 0
      %v234 = vsel %vm229, %v202, 0
      %v237 = vsel %vm229, %v203, 0
      %v240 = vsel %vm229, %v204, 0
      %vm242 = vcmask 1043456
      %v244 = vsel %vm242, %v200, 0
      %246 = vmatprep.subr.mxu0 0.0
      %247 = vmatpush1.msra.mxu0 0.0
      %248 = vmatprep.subr.mxu0 0.0
      %249 = vmatpush1.msra.mxu0 0.0
      %250 = vmatprep.subr.mxu0 0.0
      %251 = vmatpush1.msra.mxu0 0.0
      %252 = vmatprep.subr.mxu0 0.0
      %253 = vmatpush1.msra.mxu0 0.0
      %254 = vmatprep.subr.mxu0 0.0
      %255 = vmatpush1.msra.mxu0 0.0
      %256 = vmatprep.subr.mxu0 0.0
      %257 = vmatpush1.msra.mxu0 0.0
      %258 = vmatprep.subr.mxu0 0.0
      %259 = vmatpush1.msra.mxu0 0.0
      %260 = vmatprep.subr.mxu0 0.0
      %261 = vmatpush1.msra.mxu0 0.0
      %262 = vmatprep.subr.mxu0 0.0
      %263 = vmatpush1.msra.mxu0 0.0
      %264 = vmatprep.subr.mxu0 0.0
      %265 = vmatpush1.msra.mxu0 0.0
      %266 = vmatprep.subr.mxu0 0.0
      %267 = vmatpush1.msra.mxu0 0.0
      %268 = vmatprep.subr.mxu0 0.0
      %269 = vmatpush1.msra.mxu0 0.0
      %270 = vmatprep.subr.mxu0 0.0
      %271 = vmatpush1.msra.mxu0 0.0
      %272 = vmatprep.subr.mxu0 0.0
      %273 = vmatpush1.msra.mxu0 0.0
      %274 = vmatprep.subr.mxu0 0.0
      %275 = vmatpush1.msra.mxu0 0.0
      %276 = vmatprep.subr.mxu0 0.0
      %277 = vmatpush1.msra.mxu0 %v244
      %278 = vmatprep.subr.mxu0 0.0
      %279 = vmatpush2.msra.mxu0 0.0
      %280 = vmatprep.subr.mxu0 0.0
      %281 = vmatpush2.msra.mxu0 0.0
      %282 = vmatprep.subr.mxu0 0.0
      %283 = vmatpush2.msra.mxu0 0.0
      %284 = vmatprep.subr.mxu0 0.0
      %285 = vmatpush2.msra.mxu0 0.0
      %286 = vmatprep.subr.mxu0 0.0
      %287 = vmatpush2.msra.mxu0 0.0
      %288 = vmatprep.subr.mxu0 0.0
      %289 = vmatpush2.msra.mxu0 0.0
      %290 = vmatprep.subr.mxu0 0.0
      %291 = vmatpush2.msra.mxu0 0.0
      %292 = vmatprep.subr.mxu0 0.0
      %293 = vmatpush2.msra.mxu0 0.0
      %294 = vmatprep.subr.mxu0 0.0
      %295 = vmatpush2.msra.mxu0 0.0
      %296 = vmatprep.subr.mxu0 0.0
      %297 = vmatpush2.msra.mxu0 0.0
      %298 = vmatprep.subr.mxu0 0.0
      %299 = vmatpush2.msra.mxu0 0.0
      %300 = vmatprep.subr.mxu0 0.0
      %301 = vmatpush2.msra.mxu0 0.0
      %302 = vmatprep.subr.mxu0 0.0
      %303 = vmatpush2.msra.mxu0 0.0
      %304 = vmatprep.subr.mxu0 0.0
      %305 = vmatpush2.msra.mxu0 0.0
      %306 = vmatprep.subr.mxu0 0.0
      %307 = vmatpush2.msra.mxu0 0.0
      %308 = vmatprep.subr.mxu0 0.0
      %309 = vmatpush2.msra.mxu0 0.0
      %310 = vmatprep.mubr.f32.mxu0 0.0
      %311 = vmatmul.mubr.f32.gmra.mxu0 %v231
      %v312 = vpop.f32.mrf.mxu0
      %v313 = vadd.f32 %v212, %v312
      %v314 = vpop.f32.mrf.mxu0
      %315 = vmatprep.mubr.f32.mxu0 0.0
      %316 = vmatmul.mubr.f32.gmra.mxu0 %v234
      %v317 = vpop.f32.mrf.mxu0
      %v318 = vadd.f32 %v217, %v317
      %v319 = vpop.f32.mrf.mxu0
      %320 = vmatprep.mubr.f32.mxu0 0.0
      %321 = vmatmul.mubr.f32.gmra.mxu0 %v237
      %v322 = vpop.f32.mrf.mxu0
      %v323 = vadd.f32 %v222, %v322
      %v324 = vpop.f32.mrf.mxu0
      %325 = vmatprep.mubr.f32.mxu0 0.0
      %326 = vmatmul.mubr.f32.gmra.mxu0 %v240
      %v327 = vpop.f32.mrf.mxu0
      %v328 = vadd.f32 %v227, %v327
      %v329 = vpop.f32.mrf.mxu0
      %330 = vdwg.mxu0
      %v331 = vmax.f32 %v313, 0.0
      %v332 = vmax.f32 %v318, 0.0
      %v333 = vmax.f32 %v323, 0.0
      %v334 = vmax.f32 %v328, 0.0
      %v335 = vld [vmem:[#allocation2] sm:$0xff]
      %v336 = vld [vmem:[#allocation2 + $0x8] sm:$0xff]
      %v337 = vld [vmem:[#allocation2 + $0x10] sm:$0xff]
      %v338 = vld [vmem:[#allocation2 + $0x18] sm:$0xff]
      %vm339 = vcmask 130048
      %v340 = vsel %vm339, %v331, 0.0
      %341 = vadd.xlane.f32.xlu0 %v340
      %v342 = vpop.xlane.xlu0 %341
      %v343 = vsel %vm339, %v332, 0.0
      %344 = vadd.xlane.f32.xlu0 %v343
      %v345 = vpop.xlane.xlu0 %344
      %v346 = vsel %vm339, %v333, 0.0
      %347 = vadd.xlane.f32.xlu0 %v346
      %v348 = vpop.xlane.xlu0 %347
      %v349 = vsel %vm339, %v334, 0.0
      %350 = vadd.xlane.f32.xlu0 %v349
      %v351 = vpop.xlane.xlu0 %350
      %v352 = vadd.f32 %v335, %v342
      %v353 = vadd.f32 %v336, %v345
      %v354 = vadd.f32 %v337, %v348
      %v355 = vadd.f32 %v338, %v351
      %vm356 = vcmask 7168
      %357 = vst.msk [vmem:[#allocation2] sm:$0xff] %vm356, %v352
      %358 = vst.msk [vmem:[#allocation2 + $0x8] sm:$0xff] %vm356, %v353
      %359 = vst.msk [vmem:[#allocation2 + $0x10] sm:$0xff] %vm356, %v354
      %360 = vst.msk [vmem:[#allocation2 + $0x18] sm:$0xff] %vm356, %v355
      // Predicated region
      $region37: #{tpu_custom_call.1} parent=31 // pred_check
        %p361 = pneg %p191
      $region38: #{tpu_custom_call.1} parent=31 // pred_check_branch
        %363 = sbr.rel (%p361) target = $region40
      $region39: #{tpu_custom_call.1} parent=31 // pred_region
        %v364 = vld [vmem:[#allocation2] sm:$0xff]
        %v365 = vld [vmem:[#allocation2 + $0x8] sm:$0xff]
        %v366 = vld [vmem:[#allocation2 + $0x10] sm:$0xff]
        %v367 = vld [vmem:[#allocation2 + $0x18] sm:$0xff]
        %368 = vst.msk [vmem:[%s190] sm:$0xff] %vm356, %v364
        %369 = vst.msk [vmem:[%s190 + $0x8] sm:$0xff] %vm356, %v365
        %370 = vst.msk [vmem:[%s190 + $0x10] sm:$0xff] %vm356, %v366
        %371 = vst.msk [vmem:[%s190 + $0x18] sm:$0xff] %vm356, %v367
      $region40: #{tpu_custom_call.1} parent=31 // pred_fallthru
        _
      %p372 = scmp.lt.s32.totalorder %s18, 1
      %s373 = scalar_select %p372, %s18, 1
      %s374 = smul.addr %s373, 4
      %s375 = smul.addr %s374, 8
      %s376 = scalar_lea.vmem %s3, %s375
      // Predicated region
      $region41: #{tpu_custom_call.1} parent=31 // pred_check
        %p377 = pneg %p114
      $region42: #{tpu_custom_call.1} parent=31 // pred_check_branch
        %379 = sbr.rel (%p377) target = $region44
      $region43: #{tpu_custom_call.1} parent=31 // pred_region
        _
      $region44: #{tpu_custom_call.1} parent=31 // pred_fallthru
        _
    $region32: #{tpu_custom_call.1} parent=5 // pred_fallthru
      _
    %p380 = scmp.le.s32.totalorder 2, %s9
    // Predicated region
    $region45: #{tpu_custom_call.1} parent=5 // pred_check
      %p381 = pneg %p380
    $region46: #{tpu_custom_call.1} parent=5 // pred_check_branch
      %383 = sbr.rel (%p381) target = $region48
    $region47: #{tpu_custom_call.1} parent=5 // pred_region
      %s384 = ssub.s32 %s9, 2
      // Predicated region
      $region49: #{tpu_custom_call.1} parent=47 // pred_check
        %p385 = pneg %p120
      $region50: #{tpu_custom_call.1} parent=47 // pred_check_branch
        %387 = sbr.rel (%p385) target = $region52
      $region51: #{tpu_custom_call.1} parent=47 // pred_region
        %p388 = scmp.lt.s32.totalorder %s20, 1
        %s389 = scalar_select %p388, %s20, 1
        %s390 = smul.addr %s389, 4
        %s391 = smul.addr %s390, 8
        %s392 = scalar_lea.vmem %s3, %s391
      $region52: #{tpu_custom_call.1} parent=47 // pred_fallthru
        _
    $region48: #{tpu_custom_call.1} parent=5 // pred_fallthru
      _
  $region6: #{tpu_custom_call.1} parent=0 // loop_footer
    %s13 = sadd.s32 1, %s9
  $region7: #{tpu_custom_call.1} parent=0 // loop_footer_branch
    %8 = sbr.rel target = $region3
  $region8: #{tpu_custom_call.1} parent=0 // loop_exit
    _

</llo_original>
